<compile_context>
chip_gen: v6e
topology: v6e:2x2x1
jax: 0.10.0
libtpu: 0.0.40
codegen_flags: <defaults>
</compile_context>

<pallas_src>
import functools

import jax
import jax.numpy as jnp
from jax.experimental import pallas as pl
from jax.experimental.pallas import tpu as pltpu


def _lstm_dynamics_kernel(x_ref, wih_ref, whh_ref, b_ref, wlin_ref, blin_ref,
                          out_ref, *, batch, seq_len, hidden_size):
    """Single-invocation kernel: 1-layer LSTM recurrence + Linear head.

    x_ref:    (S*B, V)   time-major inputs; rows [t*B, (t+1)*B) = timestep t
    wih_ref:  (V, 4H)    input->gates weights (pre-transposed)
    whh_ref:  (H, 4H)    hidden->gates weights (pre-transposed)
    b_ref:    (1, 4H)    b_ih + b_hh
    wlin_ref: (S*H, V)   linear weights (pre-transposed)
    blin_ref: (1, V)     linear bias
    out_ref:  (B, V)     output
    """
    B, S, H = batch, seq_len, hidden_size

    # Hoisted input projection: one matmul covers every timestep's x @ W_ih + b,
    # so only the h @ W_hh matmul remains on the serial recurrence path.
    xg = (jnp.dot(x_ref[...], wih_ref[...], preferred_element_type=jnp.float32)
          + b_ref[...])                                    # (S*B, 4H)

    whh = whh_ref[...]                                     # load once, stays in vregs

    # Recurrent state lives in vregs (Python-carried values) — no VMEM scratch.
    h = jnp.zeros((B, H), jnp.float32)
    c = jnp.zeros((B, H), jnp.float32)
    hs = []

    # seq is small and static -> statically unrolled loop (traced once, LLO
    # scheduler sees the whole chain).
    for t in range(S):
        gates = xg[t * B:(t + 1) * B, :] + jnp.dot(
            h, whh, preferred_element_type=jnp.float32)    # (B, 4H), order: i, f, g, o

        # Fused activations: one sigmoid pass and one tanh pass over the whole
        # (B, 4H) gate vector, then slice the activated results per gate.
        sig = jax.nn.sigmoid(gates)
        tnh = jnp.tanh(gates)
        i_g = sig[:, 0 * H:1 * H]
        f_g = sig[:, 1 * H:2 * H]
        g_g = tnh[:, 2 * H:3 * H]
        o_g = sig[:, 3 * H:4 * H]

        c = f_g * c + i_g * g_g
        h = o_g * jnp.tanh(c)
        hs.append(h)

    # Linear head: matches torch's outputs.reshape(B, S*H) @ W_lin.T + b_lin,
    # done as ONE matmul after the loop (off the serial chain).
    seq_out = jnp.concatenate(hs, axis=1)                  # (B, S*H)
    out = (jnp.dot(seq_out, wlin_ref[...], preferred_element_type=jnp.float32)
           + blin_ref[...])
    out_ref[...] = out.astype(out_ref.dtype)


def lstm_dynamics_forward(t, x, params, *, hidden_size):
    """Pallas wrapper. `t` is unused (matches the PyTorch forward signature)."""
    del t
    B, S, V = x.shape
    H = hidden_size

    w_ih, w_hh, b_ih, b_hh, w_lin, b_lin = params
    # Pre-transpose weights so the kernel only does (rows, in) @ (in, out) matmuls.
    wih_t = jnp.transpose(w_ih)                    # (V, 4H)
    whh_t = jnp.transpose(w_hh)                    # (H, 4H)
    b = (b_ih + b_hh).reshape(1, 4 * H)            # (1, 4H)
    wlin_t = jnp.transpose(w_lin)                  # (S*H, V)
    blin = b_lin.reshape(1, V)                     # (1, V)

    # Time-major layout so timestep t is a contiguous leading-dim row block and
    # the whole input projection can be a single matmul inside the kernel.
    # (Layout plumbing done once in the wrapper, outside the serial path.)
    x_tb = jnp.transpose(x, (1, 0, 2)).reshape(S * B, V)   # (S*B, V)

    kernel = functools.partial(_lstm_dynamics_kernel,
                               batch=B, seq_len=S, hidden_size=H)

    # TODO(synk): if many independent (ensemble/MPC) problems are evaluated, fold
    # them into one pallas_call with a grid axis + dimension_semantics=("parallel",)
    # to amortize launch overhead / use both TCs on v7x.
    return pl.pallas_call(
        kernel,
        out_shape=jax.ShapeDtypeStruct((B, V), jnp.float32),
        in_specs=[pl.BlockSpec(memory_space=pltpu.MemorySpace.VMEM)] * 6,
        out_specs=pl.BlockSpec(memory_space=pltpu.MemorySpace.VMEM),
    )(x_tb, wih_t, whh_t, b, wlin_t, blin)


def lstm_dynamics_reference(x, params, *, hidden_size):
    """Pure-JAX reference (mirrors torch semantics) for validation."""
    B, S, V = x.shape
    H = hidden_size
    w_ih, w_hh, b_ih, b_hh, w_lin, b_lin = params
    h = jnp.zeros((B, H), jnp.float32)
    c = jnp.zeros((B, H), jnp.float32)
    outs = []
    for t in range(S):
        gates = x[:, t, :] @ w_ih.T + b_ih + h @ w_hh.T + b_hh
        i_g = jax.nn.sigmoid(gates[:, 0 * H:1 * H])
        f_g = jax.nn.sigmoid(gates[:, 1 * H:2 * H])
        g_g = jnp.tanh(gates[:, 2 * H:3 * H])
        o_g = jax.nn.sigmoid(gates[:, 3 * H:4 * H])
        c = f_g * c + i_g * g_g
        h = o_g * jnp.tanh(c)
        outs.append(h)
    seq_out = jnp.stack(outs, axis=1).reshape(B, S * H)
    return seq_out @ w_lin.T + b_lin


def init_params(key, num_vars, window_size, hidden_size):
    """Deterministic synthetic init with the same shapes as the torch module."""
    H = hidden_size
    S = window_size - 1
    ks = jax.random.split(key, 6)
    scale = 0.1
    w_ih = scale * jax.random.normal(ks[0], (4 * H, num_vars), jnp.float32)
    w_hh = scale * jax.random.normal(ks[1], (4 * H, H), jnp.float32)
    b_ih = scale * jax.random.normal(ks[2], (4 * H,), jnp.float32)
    b_hh = scale * jax.random.normal(ks[3], (4 * H,), jnp.float32)
    w_lin = scale * jax.random.normal(ks[4], (num_vars, H * S), jnp.float32)
    b_lin = scale * jax.random.normal(ks[5], (num_vars,), jnp.float32)
    return (w_ih, w_hh, b_ih, b_hh, w_lin, b_lin)


if __name__ == "__main__":
    num_vars = 4
    window_size = 8          # -> seq len = 7
    hidden_size = 32
    batch = 2

    key = jax.random.PRNGKey(0)
    k_params, k_x = jax.random.split(key)
    params = init_params(k_params, num_vars, window_size, hidden_size)
    x = jax.random.normal(k_x, (batch, window_size - 1, num_vars), jnp.float32)
    t = jnp.zeros((), jnp.float32)   # unused, matches forward(t, x)

    out = lstm_dynamics_forward(t, x, params, hidden_size=hidden_size)
    out = jax.block_until_ready(out)

    ref = lstm_dynamics_reference(x, params, hidden_size=hidden_size)
    assert out.shape == (batch, num_vars)
    assert jnp.allclose(out, ref, atol=1e-5, rtol=1e-5), "mismatch vs reference"

    print("KERNEL_OK")
</pallas_src>

<mosaic_0001>
module attributes {stable_mosaic.version = 11 : i64} {
  func.func @_lstm_dynamics_kernel(%arg0: memref<14x4xf32, #tpu.memory_space<vmem>>, %arg1: memref<4x128xf32, #tpu.memory_space<vmem>>, %arg2: memref<32x128xf32, #tpu.memory_space<vmem>>, %arg3: memref<1x128xf32, #tpu.memory_space<vmem>>, %arg4: memref<224x4xf32, #tpu.memory_space<vmem>>, %arg5: memref<1x4xf32, #tpu.memory_space<vmem>>, %arg6: memref<2x4xf32, #tpu.memory_space<vmem>>) attributes {dimension_semantics = [], scalar_prefetch = 0 : i64, scratch_operands = 0 : i64, tpu.core_type = #tpu.core_type<tc>} {
    %c0 = arith.constant 0 : index
    %c0_0 = arith.constant 0 : index
    %0 = vector.load %arg0[%c0, %c0_0] : memref<14x4xf32, #tpu.memory_space<vmem>>, vector<14x4xf32>
    %c0_1 = arith.constant 0 : index
    %c0_2 = arith.constant 0 : index
    %1 = vector.load %arg1[%c0_1, %c0_2] : memref<4x128xf32, #tpu.memory_space<vmem>>, vector<4x128xf32>
    %cst = arith.constant dense<0.000000e+00> : vector<14x128xf32>
    %2 = tpu.matmul %0, %1, %cst {dimension_numbers = #tpu.dot_dimension_numbers<[1], [0], [0], [1], [0, 0, 1, 1], [], []>} : vector<14x4xf32>, vector<4x128xf32>, vector<14x128xf32> -> vector<14x128xf32>
    %c0_3 = arith.constant 0 : index
    %c0_4 = arith.constant 0 : index
    %3 = vector.load %arg3[%c0_3, %c0_4] : memref<1x128xf32, #tpu.memory_space<vmem>>, vector<1x128xf32>
    %4 = vector.broadcast %3 : vector<1x128xf32> to vector<14x128xf32>
    %5 = arith.addf %2, %4 : vector<14x128xf32>
    %c0_5 = arith.constant 0 : index
    %c0_6 = arith.constant 0 : index
    %6 = vector.load %arg2[%c0_5, %c0_6] : memref<32x128xf32, #tpu.memory_space<vmem>>, vector<32x128xf32>
    %cst_7 = arith.constant 0.000000e+00 : f32
    %7 = vector.broadcast %cst_7 : f32 to vector<2x32xf32>
    %cst_8 = arith.constant 0.000000e+00 : f32
    %8 = vector.broadcast %cst_8 : f32 to vector<2x32xf32>
    %9 = vector.extract_strided_slice %5 {offsets = [0, 0], sizes = [2, 128], strides = [1, 1]} : vector<14x128xf32> to vector<2x128xf32>
    %cst_9 = arith.constant dense<0.000000e+00> : vector<2x128xf32>
    %10 = tpu.matmul %7, %6, %cst_9 {dimension_numbers = #tpu.dot_dimension_numbers<[1], [0], [0], [1], [0, 0, 1, 1], [], []>} : vector<2x32xf32>, vector<32x128xf32>, vector<2x128xf32> -> vector<2x128xf32>
    %11 = arith.addf %9, %10 : vector<2x128xf32>
    %12 = arith.negf %11 : vector<2x128xf32>
    %13 = math.exp %12 : vector<2x128xf32>
    %cst_10 = arith.constant 1.000000e+00 : f32
    %14 = vector.broadcast %cst_10 : f32 to vector<2x128xf32>
    %15 = arith.addf %14, %13 : vector<2x128xf32>
    %16 = arith.divf %14, %15 : vector<2x128xf32>
    %17 = math.tanh %11 : vector<2x128xf32>
    %18 = vector.extract_strided_slice %16 {offsets = [0, 0], sizes = [2, 32], strides = [1, 1]} : vector<2x128xf32> to vector<2x32xf32>
    %19 = vector.extract_strided_slice %16 {offsets = [0, 32], sizes = [2, 32], strides = [1, 1]} : vector<2x128xf32> to vector<2x32xf32>
    %20 = vector.extract_strided_slice %17 {offsets = [0, 64], sizes = [2, 32], strides = [1, 1]} : vector<2x128xf32> to vector<2x32xf32>
    %21 = vector.extract_strided_slice %16 {offsets = [0, 96], sizes = [2, 32], strides = [1, 1]} : vector<2x128xf32> to vector<2x32xf32>
    %22 = arith.mulf %19, %8 : vector<2x32xf32>
    %23 = arith.mulf %18, %20 : vector<2x32xf32>
    %24 = arith.addf %22, %23 : vector<2x32xf32>
    %25 = math.tanh %24 : vector<2x32xf32>
    %26 = arith.mulf %21, %25 : vector<2x32xf32>
    %27 = vector.extract_strided_slice %5 {offsets = [2, 0], sizes = [2, 128], strides = [1, 1]} : vector<14x128xf32> to vector<2x128xf32>
    %cst_11 = arith.constant dense<0.000000e+00> : vector<2x128xf32>
    %28 = tpu.matmul %26, %6, %cst_11 {dimension_numbers = #tpu.dot_dimension_numbers<[1], [0], [0], [1], [0, 0, 1, 1], [], []>} : vector<2x32xf32>, vector<32x128xf32>, vector<2x128xf32> -> vector<2x128xf32>
    %29 = arith.addf %27, %28 : vector<2x128xf32>
    %30 = arith.negf %29 : vector<2x128xf32>
    %31 = math.exp %30 : vector<2x128xf32>
    %cst_12 = arith.constant 1.000000e+00 : f32
    %32 = vector.broadcast %cst_12 : f32 to vector<2x128xf32>
    %33 = arith.addf %32, %31 : vector<2x128xf32>
    %34 = arith.divf %32, %33 : vector<2x128xf32>
    %35 = math.tanh %29 : vector<2x128xf32>
    %36 = vector.extract_strided_slice %34 {offsets = [0, 0], sizes = [2, 32], strides = [1, 1]} : vector<2x128xf32> to vector<2x32xf32>
    %37 = vector.extract_strided_slice %34 {offsets = [0, 32], sizes = [2, 32], strides = [1, 1]} : vector<2x128xf32> to vector<2x32xf32>
    %38 = vector.extract_strided_slice %35 {offsets = [0, 64], sizes = [2, 32], strides = [1, 1]} : vector<2x128xf32> to vector<2x32xf32>
    %39 = vector.extract_strided_slice %34 {offsets = [0, 96], sizes = [2, 32], strides = [1, 1]} : vector<2x128xf32> to vector<2x32xf32>
    %40 = arith.mulf %37, %24 : vector<2x32xf32>
    %41 = arith.mulf %36, %38 : vector<2x32xf32>
    %42 = arith.addf %40, %41 : vector<2x32xf32>
    %43 = math.tanh %42 : vector<2x32xf32>
    %44 = arith.mulf %39, %43 : vector<2x32xf32>
    %45 = vector.extract_strided_slice %5 {offsets = [4, 0], sizes = [2, 128], strides = [1, 1]} : vector<14x128xf32> to vector<2x128xf32>
    %cst_13 = arith.constant dense<0.000000e+00> : vector<2x128xf32>
    %46 = tpu.matmul %44, %6, %cst_13 {dimension_numbers = #tpu.dot_dimension_numbers<[1], [0], [0], [1], [0, 0, 1, 1], [], []>} : vector<2x32xf32>, vector<32x128xf32>, vector<2x128xf32> -> vector<2x128xf32>
    %47 = arith.addf %45, %46 : vector<2x128xf32>
    %48 = arith.negf %47 : vector<2x128xf32>
    %49 = math.exp %48 : vector<2x128xf32>
    %cst_14 = arith.constant 1.000000e+00 : f32
    %50 = vector.broadcast %cst_14 : f32 to vector<2x128xf32>
    %51 = arith.addf %50, %49 : vector<2x128xf32>
    %52 = arith.divf %50, %51 : vector<2x128xf32>
    %53 = math.tanh %47 : vector<2x128xf32>
    %54 = vector.extract_strided_slice %52 {offsets = [0, 0], sizes = [2, 32], strides = [1, 1]} : vector<2x128xf32> to vector<2x32xf32>
    %55 = vector.extract_strided_slice %52 {offsets = [0, 32], sizes = [2, 32], strides = [1, 1]} : vector<2x128xf32> to vector<2x32xf32>
    %56 = vector.extract_strided_slice %53 {offsets = [0, 64], sizes = [2, 32], strides = [1, 1]} : vector<2x128xf32> to vector<2x32xf32>
    %57 = vector.extract_strided_slice %52 {offsets = [0, 96], sizes = [2, 32], strides = [1, 1]} : vector<2x128xf32> to vector<2x32xf32>
    %58 = arith.mulf %55, %42 : vector<2x32xf32>
    %59 = arith.mulf %54, %56 : vector<2x32xf32>
    %60 = arith.addf %58, %59 : vector<2x32xf32>
    %61 = math.tanh %60 : vector<2x32xf32>
    %62 = arith.mulf %57, %61 : vector<2x32xf32>
    %63 = vector.extract_strided_slice %5 {offsets = [6, 0], sizes = [2, 128], strides = [1, 1]} : vector<14x128xf32> to vector<2x128xf32>
    %cst_15 = arith.constant dense<0.000000e+00> : vector<2x128xf32>
    %64 = tpu.matmul %62, %6, %cst_15 {dimension_numbers = #tpu.dot_dimension_numbers<[1], [0], [0], [1], [0, 0, 1, 1], [], []>} : vector<2x32xf32>, vector<32x128xf32>, vector<2x128xf32> -> vector<2x128xf32>
    %65 = arith.addf %63, %64 : vector<2x128xf32>
    %66 = arith.negf %65 : vector<2x128xf32>
    %67 = math.exp %66 : vector<2x128xf32>
    %cst_16 = arith.constant 1.000000e+00 : f32
    %68 = vector.broadcast %cst_16 : f32 to vector<2x128xf32>
    %69 = arith.addf %68, %67 : vector<2x128xf32>
    %70 = arith.divf %68, %69 : vector<2x128xf32>
    %71 = math.tanh %65 : vector<2x128xf32>
    %72 = vector.extract_strided_slice %70 {offsets = [0, 0], sizes = [2, 32], strides = [1, 1]} : vector<2x128xf32> to vector<2x32xf32>
    %73 = vector.extract_strided_slice %70 {offsets = [0, 32], sizes = [2, 32], strides = [1, 1]} : vector<2x128xf32> to vector<2x32xf32>
    %74 = vector.extract_strided_slice %71 {offsets = [0, 64], sizes = [2, 32], strides = [1, 1]} : vector<2x128xf32> to vector<2x32xf32>
    %75 = vector.extract_strided_slice %70 {offsets = [0, 96], sizes = [2, 32], strides = [1, 1]} : vector<2x128xf32> to vector<2x32xf32>
    %76 = arith.mulf %73, %60 : vector<2x32xf32>
    %77 = arith.mulf %72, %74 : vector<2x32xf32>
    %78 = arith.addf %76, %77 : vector<2x32xf32>
    %79 = math.tanh %78 : vector<2x32xf32>
    %80 = arith.mulf %75, %79 : vector<2x32xf32>
    %81 = vector.extract_strided_slice %5 {offsets = [8, 0], sizes = [2, 128], strides = [1, 1]} : vector<14x128xf32> to vector<2x128xf32>
    %cst_17 = arith.constant dense<0.000000e+00> : vector<2x128xf32>
    %82 = tpu.matmul %80, %6, %cst_17 {dimension_numbers = #tpu.dot_dimension_numbers<[1], [0], [0], [1], [0, 0, 1, 1], [], []>} : vector<2x32xf32>, vector<32x128xf32>, vector<2x128xf32> -> vector<2x128xf32>
    %83 = arith.addf %81, %82 : vector<2x128xf32>
    %84 = arith.negf %83 : vector<2x128xf32>
    %85 = math.exp %84 : vector<2x128xf32>
    %cst_18 = arith.constant 1.000000e+00 : f32
    %86 = vector.broadcast %cst_18 : f32 to vector<2x128xf32>
    %87 = arith.addf %86, %85 : vector<2x128xf32>
    %88 = arith.divf %86, %87 : vector<2x128xf32>
    %89 = math.tanh %83 : vector<2x128xf32>
    %90 = vector.extract_strided_slice %88 {offsets = [0, 0], sizes = [2, 32], strides = [1, 1]} : vector<2x128xf32> to vector<2x32xf32>
    %91 = vector.extract_strided_slice %88 {offsets = [0, 32], sizes = [2, 32], strides = [1, 1]} : vector<2x128xf32> to vector<2x32xf32>
    %92 = vector.extract_strided_slice %89 {offsets = [0, 64], sizes = [2, 32], strides = [1, 1]} : vector<2x128xf32> to vector<2x32xf32>
    %93 = vector.extract_strided_slice %88 {offsets = [0, 96], sizes = [2, 32], strides = [1, 1]} : vector<2x128xf32> to vector<2x32xf32>
    %94 = arith.mulf %91, %78 : vector<2x32xf32>
    %95 = arith.mulf %90, %92 : vector<2x32xf32>
    %96 = arith.addf %94, %95 : vector<2x32xf32>
    %97 = math.tanh %96 : vector<2x32xf32>
    %98 = arith.mulf %93, %97 : vector<2x32xf32>
    %99 = vector.extract_strided_slice %5 {offsets = [10, 0], sizes = [2, 128], strides = [1, 1]} : vector<14x128xf32> to vector<2x128xf32>
    %cst_19 = arith.constant dense<0.000000e+00> : vector<2x128xf32>
    %100 = tpu.matmul %98, %6, %cst_19 {dimension_numbers = #tpu.dot_dimension_numbers<[1], [0], [0], [1], [0, 0, 1, 1], [], []>} : vector<2x32xf32>, vector<32x128xf32>, vector<2x128xf32> -> vector<2x128xf32>
    %101 = arith.addf %99, %100 : vector<2x128xf32>
    %102 = arith.negf %101 : vector<2x128xf32>
    %103 = math.exp %102 : vector<2x128xf32>
    %cst_20 = arith.constant 1.000000e+00 : f32
    %104 = vector.broadcast %cst_20 : f32 to vector<2x128xf32>
    %105 = arith.addf %104, %103 : vector<2x128xf32>
    %106 = arith.divf %104, %105 : vector<2x128xf32>
    %107 = math.tanh %101 : vector<2x128xf32>
    %108 = vector.extract_strided_slice %106 {offsets = [0, 0], sizes = [2, 32], strides = [1, 1]} : vector<2x128xf32> to vector<2x32xf32>
    %109 = vector.extract_strided_slice %106 {offsets = [0, 32], sizes = [2, 32], strides = [1, 1]} : vector<2x128xf32> to vector<2x32xf32>
    %110 = vector.extract_strided_slice %107 {offsets = [0, 64], sizes = [2, 32], strides = [1, 1]} : vector<2x128xf32> to vector<2x32xf32>
    %111 = vector.extract_strided_slice %106 {offsets = [0, 96], sizes = [2, 32], strides = [1, 1]} : vector<2x128xf32> to vector<2x32xf32>
    %112 = arith.mulf %109, %96 : vector<2x32xf32>
    %113 = arith.mulf %108, %110 : vector<2x32xf32>
    %114 = arith.addf %112, %113 : vector<2x32xf32>
    %115 = math.tanh %114 : vector<2x32xf32>
    %116 = arith.mulf %111, %115 : vector<2x32xf32>
    %117 = vector.extract_strided_slice %5 {offsets = [12, 0], sizes = [2, 128], strides = [1, 1]} : vector<14x128xf32> to vector<2x128xf32>
    %cst_21 = arith.constant dense<0.000000e+00> : vector<2x128xf32>
    %118 = tpu.matmul %116, %6, %cst_21 {dimension_numbers = #tpu.dot_dimension_numbers<[1], [0], [0], [1], [0, 0, 1, 1], [], []>} : vector<2x32xf32>, vector<32x128xf32>, vector<2x128xf32> -> vector<2x128xf32>
    %119 = arith.addf %117, %118 : vector<2x128xf32>
    %120 = arith.negf %119 : vector<2x128xf32>
    %121 = math.exp %120 : vector<2x128xf32>
    %cst_22 = arith.constant 1.000000e+00 : f32
    %122 = vector.broadcast %cst_22 : f32 to vector<2x128xf32>
    %123 = arith.addf %122, %121 : vector<2x128xf32>
    %124 = arith.divf %122, %123 : vector<2x128xf32>
    %125 = math.tanh %119 : vector<2x128xf32>
    %126 = vector.extract_strided_slice %124 {offsets = [0, 0], sizes = [2, 32], strides = [1, 1]} : vector<2x128xf32> to vector<2x32xf32>
    %127 = vector.extract_strided_slice %124 {offsets = [0, 32], sizes = [2, 32], strides = [1, 1]} : vector<2x128xf32> to vector<2x32xf32>
    %128 = vector.extract_strided_slice %125 {offsets = [0, 64], sizes = [2, 32], strides = [1, 1]} : vector<2x128xf32> to vector<2x32xf32>
    %129 = vector.extract_strided_slice %124 {offsets = [0, 96], sizes = [2, 32], strides = [1, 1]} : vector<2x128xf32> to vector<2x32xf32>
    %130 = arith.mulf %127, %114 : vector<2x32xf32>
    %131 = arith.mulf %126, %128 : vector<2x32xf32>
    %132 = arith.addf %130, %131 : vector<2x32xf32>
    %133 = math.tanh %132 : vector<2x32xf32>
    %134 = arith.mulf %129, %133 : vector<2x32xf32>
    %135 = tpu.concatenate %26, %44, %62, %80, %98, %116, %134 in 1 : vector<2x32xf32>, vector<2x32xf32>, vector<2x32xf32>, vector<2x32xf32>, vector<2x32xf32>, vector<2x32xf32>, vector<2x32xf32> -> vector<2x224xf32>
    %c0_23 = arith.constant 0 : index
    %c0_24 = arith.constant 0 : index
    %136 = vector.load %arg4[%c0_23, %c0_24] : memref<224x4xf32, #tpu.memory_space<vmem>>, vector<224x4xf32>
    %cst_25 = arith.constant dense<0.000000e+00> : vector<2x4xf32>
    %137 = tpu.matmul %135, %136, %cst_25 {dimension_numbers = #tpu.dot_dimension_numbers<[1], [0], [0], [1], [0, 0, 1, 1], [], []>} : vector<2x224xf32>, vector<224x4xf32>, vector<2x4xf32> -> vector<2x4xf32>
    %c0_26 = arith.constant 0 : index
    %c0_27 = arith.constant 0 : index
    %138 = vector.load %arg5[%c0_26, %c0_27] : memref<1x4xf32, #tpu.memory_space<vmem>>, vector<1x4xf32>
    %139 = vector.broadcast %138 : vector<1x4xf32> to vector<2x4xf32>
    %140 = arith.addf %137, %139 : vector<2x4xf32>
    %c0_28 = arith.constant 0 : index
    %c0_29 = arith.constant 0 : index
    %141 = vector.load %arg6[%c0_28, %c0_29] : memref<2x4xf32, #tpu.memory_space<vmem>>, vector<2x4xf32>
    tpu.vector_store %arg6[%c0_28, %c0_29], %140 {strides = array<i32>} : memref<2x4xf32, #tpu.memory_space<vmem>>, vector<2x4xf32>,
    return
  }
}

</mosaic_0001>

<llo_original>
// kernel: tpu_custom_call.1
$region0: #{tpu_custom_call.1}
  #allocation0 [shape = 'u32[]', space=smem, size = 0x4, offset = 0x4, fixed_abs, tag = 'smem constant byte address 0x4 - core index']
  #allocation1 [shape = 'u32[144,128]{1,0:T(1,128)}', space=vmem, size = 0x12000, scoped, tag = 'internal scratch']
  %s0 = inlined_call_operand.vmem [shape: f32[14,4], index: 0, kind: input, shape index: {}]
  %s1 = inlined_call_operand.vmem [shape: f32[4,128], index: 1, kind: input, shape index: {}]
  %s2 = inlined_call_operand.vmem [shape: f32[32,128], index: 2, kind: input, shape index: {}]
  %s3 = inlined_call_operand.vmem [shape: f32[1,128], index: 3, kind: input, shape index: {}]
  %s4 = inlined_call_operand.vmem [shape: f32[224,4], index: 4, kind: input, shape index: {}]
  %s5 = inlined_call_operand.vmem [shape: f32[1,4], index: 5, kind: input, shape index: {}]
  %s6 = inlined_call_operand.hbm [shape: f32[2,4], index: 6, kind: output, shape index: {}]
  %s7 = sld [smem:[#allocation0]]
  $region34: #{tpu_custom_call.1} parent=0
    _
  %s9 = ssub.s32 1, %s7
  %s10 = scalar_select 0, %s9, %s7
  $region1: #{tpu_custom_call.1} parent=0
    #allocation2 [shape = 'u8[1024]{0}', space=vmem, size = 0x400, scoped, tag = 'output window, operand 0, single buffered']
    #allocation3 [shape = 's32[1]{0}', space=sflag, size = 0x4, scoped, tag = 'scoped memory for tpu_custom_call.1']
    %11 = vsyncpa [#allocation3], 0
    // Predicated region
    $region2: #{tpu_custom_call.1} parent=1 // pred_check
      _
    $region3: #{tpu_custom_call.1} parent=1 // pred_check_branch
      %13 = sbr.rel (0) target = $region5
    $region4: #{tpu_custom_call.1} parent=1 // pred_region
      _
    $region5: #{tpu_custom_call.1} parent=1 // pred_fallthru
      _
    // Predicated region
    $region6: #{tpu_custom_call.1} parent=1 // pred_check
      _
    $region7: #{tpu_custom_call.1} parent=1 // pred_check_branch
      %15 = sbr.rel (0) target = $region9
    $region8: #{tpu_custom_call.1} parent=1 // pred_region
      _
    $region9: #{tpu_custom_call.1} parent=1 // pred_fallthru
      _
    // Predicated region
    $region10: #{tpu_custom_call.1} parent=1 // pred_check
      _
    $region11: #{tpu_custom_call.1} parent=1 // pred_check_branch
      %17 = sbr.rel (0) target = $region13
    $region12: #{tpu_custom_call.1} parent=1 // pred_region
      _
    $region13: #{tpu_custom_call.1} parent=1 // pred_fallthru
      _
    // Predicated region
    $region14: #{tpu_custom_call.1} parent=1 // pred_check
      _
    $region15: #{tpu_custom_call.1} parent=1 // pred_check_branch
      %19 = sbr.rel (0) target = $region17
    $region16: #{tpu_custom_call.1} parent=1 // pred_region
      _
    $region17: #{tpu_custom_call.1} parent=1 // pred_fallthru
      _
    // Predicated region
    $region18: #{tpu_custom_call.1} parent=1 // pred_check
      _
    $region19: #{tpu_custom_call.1} parent=1 // pred_check_branch
      %21 = sbr.rel (0) target = $region21
    $region20: #{tpu_custom_call.1} parent=1 // pred_region
      _
    $region21: #{tpu_custom_call.1} parent=1 // pred_fallthru
      _
    // Predicated region
    $region22: #{tpu_custom_call.1} parent=1 // pred_check
      _
    $region23: #{tpu_custom_call.1} parent=1 // pred_check_branch
      %23 = sbr.rel (0) target = $region25
    $region24: #{tpu_custom_call.1} parent=1 // pred_region
      _
    $region25: #{tpu_custom_call.1} parent=1 // pred_fallthru
      _
    %v24 = vld [vmem:[%s0] sm:$0xff]
    %v25 = vld [vmem:[%s0 + $0x8] sm:$0x3f]
    %v26 = vld [vmem:[%s1] sm:$0xf]
    %v27 = vld [vmem:[%s3] sm:$0x1]
    %v29 = vlaneseq
    %v30 = vshrl.u32 %v29, 7
    %v31 = vsub.s32 0, %v30
    %v32 = vrot.slane %v27, %v31
    %vm34 = vcmask 31744
    %v36 = vsel %vm34, %v24, 0
    %v39 = vsel %vm34, %v25, 0
    %vm41 = vcmask 1043456
    %v43 = vsel %vm41, %v26, 0
    %45 = vmatprep.subr.mxu0 0.0
    %46 = vmatpush1.msra.mxu0 0.0
    %47 = vmatprep.subr.mxu0 0.0
    %48 = vmatpush1.msra.mxu0 0.0
    %49 = vmatprep.subr.mxu0 0.0
    %50 = vmatpush1.msra.mxu0 0.0
    %51 = vmatprep.subr.mxu0 0.0
    %52 = vmatpush1.msra.mxu0 0.0
    %53 = vmatprep.subr.mxu0 0.0
    %54 = vmatpush1.msra.mxu0 0.0
    %55 = vmatprep.subr.mxu0 0.0
    %56 = vmatpush1.msra.mxu0 0.0
    %57 = vmatprep.subr.mxu0 0.0
    %58 = vmatpush1.msra.mxu0 0.0
    %59 = vmatprep.subr.mxu0 0.0
    %60 = vmatpush1.msra.mxu0 0.0
    %61 = vmatprep.subr.mxu0 0.0
    %62 = vmatpush1.msra.mxu0 0.0
    %63 = vmatprep.subr.mxu0 0.0
    %64 = vmatpush1.msra.mxu0 0.0
    %65 = vmatprep.subr.mxu0 0.0
    %66 = vmatpush1.msra.mxu0 0.0
    %67 = vmatprep.subr.mxu0 0.0
    %68 = vmatpush1.msra.mxu0 0.0
    %69 = vmatprep.subr.mxu0 0.0
    %70 = vmatpush1.msra.mxu0 0.0
    %71 = vmatprep.subr.mxu0 0.0
    %72 = vmatpush1.msra.mxu0 0.0
    %73 = vmatprep.subr.mxu0 0.0
    %74 = vmatpush1.msra.mxu0 0.0
    %75 = vmatprep.subr.mxu0 0.0
    %76 = vmatpush1.msra.mxu0 %v43
    %77 = vmatprep.subr.mxu0 0.0
    %78 = vmatpush2.msra.mxu0 0.0
    %79 = vmatprep.subr.mxu0 0.0
    %80 = vmatpush2.msra.mxu0 0.0
    %81 = vmatprep.subr.mxu0 0.0
    %82 = vmatpush2.msra.mxu0 0.0
    %83 = vmatprep.subr.mxu0 0.0
    %84 = vmatpush2.msra.mxu0 0.0
    %85 = vmatprep.subr.mxu0 0.0
    %86 = vmatpush2.msra.mxu0 0.0
    %87 = vmatprep.subr.mxu0 0.0
    %88 = vmatpush2.msra.mxu0 0.0
    %89 = vmatprep.subr.mxu0 0.0
    %90 = vmatpush2.msra.mxu0 0.0
    %91 = vmatprep.subr.mxu0 0.0
    %92 = vmatpush2.msra.mxu0 0.0
    %93 = vmatprep.subr.mxu0 0.0
    %94 = vmatpush2.msra.mxu0 0.0
    %95 = vmatprep.subr.mxu0 0.0
    %96 = vmatpush2.msra.mxu0 0.0
    %97 = vmatprep.subr.mxu0 0.0
    %98 = vmatpush2.msra.mxu0 0.0
    %99 = vmatprep.subr.mxu0 0.0
    %100 = vmatpush2.msra.mxu0 0.0
    %101 = vmatprep.subr.mxu0 0.0
    %102 = vmatpush2.msra.mxu0 0.0
    %103 = vmatprep.subr.mxu0 0.0
    %104 = vmatpush2.msra.mxu0 0.0
    %105 = vmatprep.subr.mxu0 0.0
    %106 = vmatpush2.msra.mxu0 0.0
    %107 = vmatprep.subr.mxu0 0.0
    %108 = vmatpush2.msra.mxu0 0.0
    %109 = vmatprep.mubr.f32.mxu0 0.0
    %110 = vmatmul.mubr.f32.gmra.mxu0 %v36
    %v111 = vpop.f32.mrf.mxu0
    %v112 = vadd.f32 %v32, %v111
    %v113 = vpop.f32.mrf.mxu0
    %114 = vmatprep.mubr.f32.mxu0 0.0
    %115 = vmatmul.mubr.f32.gmra.mxu0 %v39
    %v116 = vpop.f32.mrf.mxu0
    %v117 = vadd.f32 %v32, %v116
    %v118 = vpop.f32.mrf.mxu0
    %119 = vdwg.mxu0
    %v120 = vld [vmem:[%s2] sm:$0xff]
    %v121 = vld [vmem:[%s2 + $0x8] sm:$0xff]
    %v122 = vld [vmem:[%s2 + $0x10] sm:$0xff]
    %v123 = vld [vmem:[%s2 + $0x18] sm:$0xff]
    %vm124 = vcmask 261120
    %v126 = vsel %vm124, 0.0, 0
    %128 = vmatprep.subr.mxu0 0.0
    %129 = vmatpush1.msra.mxu0 0.0
    %130 = vmatprep.subr.mxu0 0.0
    %131 = vmatpush1.msra.mxu0 0.0
    %132 = vmatprep.subr.mxu0 0.0
    %133 = vmatpush1.msra.mxu0 0.0
    %134 = vmatprep.subr.mxu0 0.0
    %135 = vmatpush1.msra.mxu0 0.0
    %136 = vmatprep.subr.mxu0 0.0
    %137 = vmatpush1.msra.mxu0 0.0
    %138 = vmatprep.subr.mxu0 0.0
    %139 = vmatpush1.msra.mxu0 0.0
    %140 = vmatprep.subr.mxu0 0.0
    %141 = vmatpush1.msra.mxu0 0.0
    %142 = vmatprep.subr.mxu0 0.0
    %143 = vmatpush1.msra.mxu0 0.0
    %144 = vmatprep.subr.mxu0 0.0
    %145 = vmatpush1.msra.mxu0 0.0
    %146 = vmatprep.subr.mxu0 0.0
    %147 = vmatpush1.msra.mxu0 0.0
    %148 = vmatprep.subr.mxu0 0.0
    %149 = vmatpush1.msra.mxu0 0.0
    %150 = vmatprep.subr.mxu0 0.0
    %151 = vmatpush1.msra.mxu0 0.0
    %152 = vmatprep.subr.mxu0 0.0
    %153 = vmatpush1.msra.mxu0 %v123
    %154 = vmatprep.subr.mxu0 0.0
    %155 = vmatpush1.msra.mxu0 %v122
    %156 = vmatprep.subr.mxu0 0.0
    %157 = vmatpush1.msra.mxu0 %v121
    %158 = vmatprep.subr.mxu0 0.0
    %159 = vmatpush1.msra.mxu0 %v120
    %160 = vmatprep.subr.mxu0 0.0
    %161 = vmatpush2.msra.mxu0 0.0
    %162 = vmatprep.subr.mxu0 0.0
    %163 = vmatpush2.msra.mxu0 0.0
    %164 = vmatprep.subr.mxu0 0.0
    %165 = vmatpush2.msra.mxu0 0.0
    %166 = vmatprep.subr.mxu0 0.0
    %167 = vmatpush2.msra.mxu0 0.0
    %168 = vmatprep.subr.mxu0 0.0
    %169 = vmatpush2.msra.mxu0 0.0
    %170 = vmatprep.subr.mxu0 0.0
    %171 = vmatpush2.msra.mxu0 0.0
    %172 = vmatprep.subr.mxu0 0.0
    %173 = vmatpush2.msra.mxu0 0.0
    %174 = vmatprep.subr.mxu0 0.0
    %175 = vmatpush2.msra.mxu0 0.0
    %176 = vmatprep.subr.mxu0 0.0
    %177 = vmatpush2.msra.mxu0 0.0
    %178 = vmatprep.subr.mxu0 0.0
    %179 = vmatpush2.msra.mxu0 0.0
    %180 = vmatprep.subr.mxu0 0.0
    %181 = vmatpush2.msra.mxu0 0.0
    %182 = vmatprep.subr.mxu0 0.0
    %183 = vmatpush2.msra.mxu0 0.0
    %184 = vmatprep.subr.mxu0 0.0
    %185 = vmatpush2.msra.mxu0 0.0
    %186 = vmatprep.subr.mxu0 0.0
    %187 = vmatpush2.msra.mxu0 0.0
    %188 = vmatprep.subr.mxu0 0.0
    %189 = vmatpush2.msra.mxu0 0.0
    %190 = vmatprep.subr.mxu0 0.0
    %191 = vmatpush2.msra.mxu0 0.0
    %192 = vmatprep.mubr.f32.mxu0 0.0
    %193 = vmatmul.mubr.f32.gmra.mxu0 %v126
    %v194 = vpop.f32.mrf.mxu0
    %v195 = vadd.f32 0.0, %v194
    %v196 = vpop.f32.mrf.mxu0
    %197 = vdwg.mxu0
    %v198 = vadd.f32 %v112, %v195
    %v199 = vxor.u32 %v198, 2147483648
    %v200 = vmul.f32 %v199, 1.442695
    %v201 = vpow.pop %v200
    %v202 = vadd.f32 %v201, 1.0
    %v203 = vrcp.pop %v202
    %v204 = vmul.f32 1.0, %v203
    %v205 = vtanh.pop %v198
    %v206 = vmul.f32 %v204, 0.0
    %208 = vrot.lane.b32.xlu0 %v205, 64
    %v209 = vpop.permute.xlu0 %208
    %v211 = vmul.f32 %v204, %v209
    %213 = vrot.lane.b32.xlu0 %v211, 32
    %v214 = vpop.permute.xlu0 %213
    %v216 = vadd.f32 %v206, %v214
    %v217 = vtanh.pop %v216
    %219 = vrot.lane.b32.xlu0 %v217, 64
    %v220 = vpop.permute.xlu0 %219
    %v222 = vmul.f32 %v204, %v220
    %224 = vrot.lane.b32.xlu0 %v222, 32
    %v225 = vpop.permute.xlu0 %224
    %v226 = vsel %vm124, %v225, 0
    %228 = vmatprep.subr.mxu0 0.0
    %229 = vmatpush1.msra.mxu0 0.0
    %230 = vmatprep.subr.mxu0 0.0
    %231 = vmatpush1.msra.mxu0 0.0
    %232 = vmatprep.subr.mxu0 0.0
    %233 = vmatpush1.msra.mxu0 0.0
    %234 = vmatprep.subr.mxu0 0.0
    %235 = vmatpush1.msra.mxu0 0.0
    %236 = vmatprep.subr.mxu0 0.0
    %237 = vmatpush1.msra.mxu0 0.0
    %238 = vmatprep.subr.mxu0 0.0
    %239 = vmatpush1.msra.mxu0 0.0
    %240 = vmatprep.subr.mxu0 0.0
    %241 = vmatpush1.msra.mxu0 0.0
    %242 = vmatprep.subr.mxu0 0.0
    %243 = vmatpush1.msra.mxu0 0.0
    %244 = vmatprep.subr.mxu0 0.0
    %245 = vmatpush1.msra.mxu0 0.0
    %246 = vmatprep.subr.mxu0 0.0
    %247 = vmatpush1.msra.mxu0 0.0
    %248 = vmatprep.subr.mxu0 0.0
    %249 = vmatpush1.msra.mxu0 0.0
    %250 = vmatprep.subr.mxu0 0.0
    %251 = vmatpush1.msra.mxu0 0.0
    %252 = vmatprep.subr.mxu0 0.0
    %253 = vmatpush1.msra.mxu0 %v123
    %254 = vmatprep.subr.mxu0 0.0
    %255 = vmatpush1.msra.mxu0 %v122
    %256 = vmatprep.subr.mxu0 0.0
    %257 = vmatpush1.msra.mxu0 %v121
    %258 = vmatprep.subr.mxu0 0.0
    %259 = vmatpush1.msra.mxu0 %v120
    %260 = vmatprep.subr.mxu0 0.0
    %261 = vmatpush2.msra.mxu0 0.0
    %262 = vmatprep.subr.mxu0 0.0
    %263 = vmatpush2.msra.mxu0 0.0
    %264 = vmatprep.subr.mxu0 0.0
    %265 = vmatpush2.msra.mxu0 0.0
    %266 = vmatprep.subr.mxu0 0.0
    %267 = vmatpush2.msra.mxu0 0.0
    %268 = vmatprep.subr.mxu0 0.0
    %269 = vmatpush2.msra.mxu0 0.0
    %270 = vmatprep.subr.mxu0 0.0
    %271 = vmatpush2.msra.mxu0 0.0
    %272 = vmatprep.subr.mxu0 0.0
    %273 = vmatpush2.msra.mxu0 0.0
    %274 = vmatprep.subr.mxu0 0.0
    %275 = vmatpush2.msra.mxu0 0.0
    %276 = vmatprep.subr.mxu0 0.0
    %277 = vmatpush2.msra.mxu0 0.0
    %278 = vmatprep.subr.mxu0 0.0
    %279 = vmatpush2.msra.mxu0 0.0
    %280 = vmatprep.subr.mxu0 0.0
    %281 = vmatpush2.msra.mxu0 0.0
    %282 = vmatprep.subr.mxu0 0.0
    %283 = vmatpush2.msra.mxu0 0.0
    %284 = vmatprep.subr.mxu0 0.0
    %285 = vmatpush2.msra.mxu0 0.0
    %286 = vmatprep.subr.mxu0 0.0
    %287 = vmatpush2.msra.mxu0 0.0
    %288 = vmatprep.subr.mxu0 0.0
    %289 = vmatpush2.msra.mxu0 0.0
    %290 = vmatprep.subr.mxu0 0.0
    %291 = vmatpush2.msra.mxu0 0.0
    %292 = vmatprep.mubr.f32.mxu0 0.0
    %293 = vmatmul.mubr.f32.gmra.mxu0 %v226
    %v294 = vpop.f32.mrf.mxu0
    %v295 = vadd.f32 0.0, %v294
    %v296 = vpop.f32.mrf.mxu0
    %297 = vdwg.mxu0
    %v299 = vrot.slane %v295, 6
    %v301 = vadd.f32 %v112, %v299
    %v302 = vxor.u32 %v301, 2147483648
    %v303 = vmul.f32 %v302, 1.442695
    %v304 = vpow.pop %v303
    %v305 = vadd.f32 %v304, 1.0
    %v306 = vrcp.pop %v305
    %v307 = vmul.f32 1.0, %v306
    %v308 = vtanh.pop %v301
    %v310 = vrot.slane %v216, 6
    %v312 = vmul.f32 %v307, %v310
    %314 = vrot.lane.b32.xlu0 %v308, 64
    %v315 = vpop.permute.xlu0 %314
    %v317 = vmul.f32 %v307, %v315
    %319 = vrot.lane.b32.xlu0 %v317, 32
    %v320 = vpop.permute.xlu0 %319
    %v322 = vadd.f32 %v312, %v320
    %v323 = vtanh.pop %v322
    %325 = vrot.lane.b32.xlu0 %v323, 64
    %v326 = vpop.permute.xlu0 %325
    %v328 = vmul.f32 %v307, %v326
    %v330 = vrot.slane %v328, 2
    %331 = vrot.lane.b32.xlu0 %v330, 32
    %v332 = vpop.permute.xlu0 %331
    %v333 = vsel %vm124, %v332, 0
    %335 = vmatprep.subr.mxu0 0.0
    %336 = vmatpush1.msra.mxu0 0.0
    %337 = vmatprep.subr.mxu0 0.0
    %338 = vmatpush1.msra.mxu0 0.0
    %339 = vmatprep.subr.mxu0 0.0
    %340 = vmatpush1.msra.mxu0 0.0
    %341 = vmatprep.subr.mxu0 0.0
    %342 = vmatpush1.msra.mxu0 0.0
    %343 = vmatprep.subr.mxu0 0.0
    %344 = vmatpush1.msra.mxu0 0.0
    %345 = vmatprep.subr.mxu0 0.0
    %346 = vmatpush1.msra.mxu0 0.0
    %347 = vmatprep.subr.mxu0 0.0
    %348 = vmatpush1.msra.mxu0 0.0
    %349 = vmatprep.subr.mxu0 0.0
    %350 = vmatpush1.msra.mxu0 0.0
    %351 = vmatprep.subr.mxu0 0.0
    %352 = vmatpush1.msra.mxu0 0.0
    %353 = vmatprep.subr.mxu0 0.0
    %354 = vmatpush1.msra.mxu0 0.0
    %355 = vmatprep.subr.mxu0 0.0
    %356 = vmatpush1.msra.mxu0 0.0
    %357 = vmatprep.subr.mxu0 0.0
    %358 = vmatpush1.msra.mxu0 0.0
    %359 = vmatprep.subr.mxu0 0.0
    %360 = vmatpush1.msra.mxu0 %v123
    %361 = vmatprep.subr.mxu0 0.0
    %362 = vmatpush1.msra.mxu0 %v122
    %363 = vmatprep.subr.mxu0 0.0
    %364 = vmatpush1.msra.mxu0 %v121
    %365 = vmatprep.subr.mxu0 0.0
    %366 = vmatpush1.msra.mxu0 %v120
    %367 = vmatprep.subr.mxu0 0.0
    %368 = vmatpush2.msra.mxu0 0.0
    %369 = vmatprep.subr.mxu0 0.0
    %370 = vmatpush2.msra.mxu0 0.0
    %371 = vmatprep.subr.mxu0 0.0
    %372 = vmatpush2.msra.mxu0 0.0
    %373 = vmatprep.subr.mxu0 0.0
    %374 = vmatpush2.msra.mxu0 0.0
    %375 = vmatprep.subr.mxu0 0.0
    %376 = vmatpush2.msra.mxu0 0.0
    %377 = vmatprep.subr.mxu0 0.0
    %378 = vmatpush2.msra.mxu0 0.0
    %379 = vmatprep.subr.mxu0 0.0
    %380 = vmatpush2.msra.mxu0 0.0
    %381 = vmatprep.subr.mxu0 0.0
    %382 = vmatpush2.msra.mxu0 0.0
    %383 = vmatprep.subr.mxu0 0.0
    %384 = vmatpush2.msra.mxu0 0.0
    %385 = vmatprep.subr.mxu0 0.0
    %386 = vmatpush2.msra.mxu0 0.0
    %387 = vmatprep.subr.mxu0 0.0
    %388 = vmatpush2.msra.mxu0 0.0
    %389 = vmatprep.subr.mxu0 0.0
    %390 = vmatpush2.msra.mxu0 0.0
    %391 = vmatprep.subr.mxu0 0.0
    %392 = vmatpush2.msra.mxu0 0.0
    %393 = vmatprep.subr.mxu0 0.0
    %394 = vmatpush2.msra.mxu0 0.0
    %395 = vmatprep.subr.mxu0 0.0
    %396 = vmatpush2.msra.mxu0 0.0
    %397 = vmatprep.subr.mxu0 0.0
    %398 = vmatpush2.msra.mxu0 0.0
    %399 = vmatprep.mubr.f32.mxu0 0.0
    %400 = vmatmul.mubr.f32.gmra.mxu0 %v333
    %v401 = vpop.f32.mrf.mxu0
    %v402 = vadd.f32 0.0, %v401
    %v403 = vpop.f32.mrf.mxu0
    %404 = vdwg.mxu0
    %v406 = vrot.slane %v402, 4
    %v408 = vadd.f32 %v112, %v406
    %v409 = vxor.u32 %v408, 2147483648
    %v410 = vmul.f32 %v409, 1.442695
    %v411 = vpow.pop %v410
    %v412 = vadd.f32 %v411, 1.0
    %v413 = vrcp.pop %v412
    %v414 = vmul.f32 1.0, %v413
    %v415 = vtanh.pop %v408
    %v417 = vrot.slane %v322, 6
    %v419 = vmul.f32 %v414, %v417
    %421 = vrot.lane.b32.xlu0 %v415, 64
    %v422 = vpop.permute.xlu0 %421
    %v424 = vmul.f32 %v414, %v422
    %426 = vrot.lane.b32.xlu0 %v424, 32
    %v427 = vpop.permute.xlu0 %426
    %v429 = vadd.f32 %v419, %v427
    %v430 = vtanh.pop %v429
    %432 = vrot.lane.b32.xlu0 %v430, 64
    %v433 = vpop.permute.xlu0 %432
    %v435 = vmul.f32 %v414, %v433
    %v437 = vrot.slane %v435, 4
    %438 = vrot.lane.b32.xlu0 %v437, 32
    %v439 = vpop.permute.xlu0 %438
    %v440 = vsel %vm124, %v439, 0
    %442 = vmatprep.subr.mxu0 0.0
    %443 = vmatpush1.msra.mxu0 0.0
    %444 = vmatprep.subr.mxu0 0.0
    %445 = vmatpush1.msra.mxu0 0.0
    %446 = vmatprep.subr.mxu0 0.0
    %447 = vmatpush1.msra.mxu0 0.0
    %448 = vmatprep.subr.mxu0 0.0
    %449 = vmatpush1.msra.mxu0 0.0
    %450 = vmatprep.subr.mxu0 0.0
    %451 = vmatpush1.msra.mxu0 0.0
    %452 = vmatprep.subr.mxu0 0.0
    %453 = vmatpush1.msra.mxu0 0.0
    %454 = vmatprep.subr.mxu0 0.0
    %455 = vmatpush1.msra.mxu0 0.0
    %456 = vmatprep.subr.mxu0 0.0
    %457 = vmatpush1.msra.mxu0 0.0
    %458 = vmatprep.subr.mxu0 0.0
    %459 = vmatpush1.msra.mxu0 0.0
    %460 = vmatprep.subr.mxu0 0.0
    %461 = vmatpush1.msra.mxu0 0.0
    %462 = vmatprep.subr.mxu0 0.0
    %463 = vmatpush1.msra.mxu0 0.0
    %464 = vmatprep.subr.mxu0 0.0
    %465 = vmatpush1.msra.mxu0 0.0
    %466 = vmatprep.subr.mxu0 0.0
    %467 = vmatpush1.msra.mxu0 %v123
    %468 = vmatprep.subr.mxu0 0.0
    %469 = vmatpush1.msra.mxu0 %v122
    %470 = vmatprep.subr.mxu0 0.0
    %471 = vmatpush1.msra.mxu0 %v121
    %472 = vmatprep.subr.mxu0 0.0
    %473 = vmatpush1.msra.mxu0 %v120
    %474 = vmatprep.subr.mxu0 0.0
    %475 = vmatpush2.msra.mxu0 0.0
    %476 = vmatprep.subr.mxu0 0.0
    %477 = vmatpush2.msra.mxu0 0.0
    %478 = vmatprep.subr.mxu0 0.0
    %479 = vmatpush2.msra.mxu0 0.0
    %480 = vmatprep.subr.mxu0 0.0
    %481 = vmatpush2.msra.mxu0 0.0
    %482 = vmatprep.subr.mxu0 0.0
    %483 = vmatpush2.msra.mxu0 0.0
    %484 = vmatprep.subr.mxu0 0.0
    %485 = vmatpush2.msra.mxu0 0.0
    %486 = vmatprep.subr.mxu0 0.0
    %487 = vmatpush2.msra.mxu0 0.0
    %488 = vmatprep.subr.mxu0 0.0
    %489 = vmatpush2.msra.mxu0 0.0
    %490 = vmatprep.subr.mxu0 0.0
    %491 = vmatpush2.msra.mxu0 0.0
    %492 = vmatprep.subr.mxu0 0.0
    %493 = vmatpush2.msra.mxu0 0.0
    %494 = vmatprep.subr.mxu0 0.0
    %495 = vmatpush2.msra.mxu0 0.0
    %496 = vmatprep.subr.mxu0 0.0
    %497 = vmatpush2.msra.mxu0 0.0
    %498 = vmatprep.subr.mxu0 0.0
    %499 = vmatpush2.msra.mxu0 0.0
    %500 = vmatprep.subr.mxu0 0.0
    %501 = vmatpush2.msra.mxu0 0.0
    %502 = vmatprep.subr.mxu0 0.0
    %503 = vmatpush2.msra.mxu0 0.0
    %504 = vmatprep.subr.mxu0 0.0
    %505 = vmatpush2.msra.mxu0 0.0
    %506 = vmatprep.mubr.f32.mxu0 0.0
    %507 = vmatmul.mubr.f32.gmra.mxu0 %v440
    %v508 = vpop.f32.mrf.mxu0
    %v509 = vadd.f32 0.0, %v508
    %v510 = vpop.f32.mrf.mxu0
    %511 = vdwg.mxu0
    %v513 = vrot.slane %v509, 2
    %v515 = vadd.f32 %v112, %v513
    %v516 = vxor.u32 %v515, 2147483648
    %v517 = vmul.f32 %v516, 1.442695
    %v518 = vpow.pop %v517
    %v519 = vadd.f32 %v518, 1.0
    %v520 = vrcp.pop %v519
    %v521 = vmul.f32 1.0, %v520
    %v522 = vtanh.pop %v515
    %v524 = vrot.slane %v429, 6
    %v526 = vmul.f32 %v521, %v524
    %528 = vrot.lane.b32.xlu0 %v522, 64
    %v529 = vpop.permute.xlu0 %528
    %v531 = vmul.f32 %v521, %v529
    %533 = vrot.lane.b32.xlu0 %v531, 32
    %v534 = vpop.permute.xlu0 %533
    %v536 = vadd.f32 %v526, %v534
    %v537 = vtanh.pop %v536
    %539 = vrot.lane.b32.xlu0 %v537, 64
    %v540 = vpop.permute.xlu0 %539
    %v542 = vmul.f32 %v521, %v540
    %v544 = vrot.slane %v542, 6
    %545 = vrot.lane.b32.xlu0 %v544, 32
    %v546 = vpop.permute.xlu0 %545
    %v547 = vsel %vm124, %v546, 0
    %549 = vmatprep.subr.mxu0 0.0
    %550 = vmatpush1.msra.mxu0 0.0
    %551 = vmatprep.subr.mxu0 0.0
    %552 = vmatpush1.msra.mxu0 0.0
    %553 = vmatprep.subr.mxu0 0.0
    %554 = vmatpush1.msra.mxu0 0.0
    %555 = vmatprep.subr.mxu0 0.0
    %556 = vmatpush1.msra.mxu0 0.0
    %557 = vmatprep.subr.mxu0 0.0
    %558 = vmatpush1.msra.mxu0 0.0
    %559 = vmatprep.subr.mxu0 0.0
    %560 = vmatpush1.msra.mxu0 0.0
    %561 = vmatprep.subr.mxu0 0.0
    %562 = vmatpush1.msra.mxu0 0.0
    %563 = vmatprep.subr.mxu0 0.0
    %564 = vmatpush1.msra.mxu0 0.0
    %565 = vmatprep.subr.mxu0 0.0
    %566 = vmatpush1.msra.mxu0 0.0
    %567 = vmatprep.subr.mxu0 0.0
    %568 = vmatpush1.msra.mxu0 0.0
    %569 = vmatprep.subr.mxu0 0.0
    %570 = vmatpush1.msra.mxu0 0.0
    %571 = vmatprep.subr.mxu0 0.0
    %572 = vmatpush1.msra.mxu0 0.0
    %573 = vmatprep.subr.mxu0 0.0
    %574 = vmatpush1.msra.mxu0 %v123
    %575 = vmatprep.subr.mxu0 0.0
    %576 = vmatpush1.msra.mxu0 %v122
    %577 = vmatprep.subr.mxu0 0.0
    %578 = vmatpush1.msra.mxu0 %v121
    %579 = vmatprep.subr.mxu0 0.0
    %580 = vmatpush1.msra.mxu0 %v120
    %581 = vmatprep.subr.mxu0 0.0
    %582 = vmatpush2.msra.mxu0 0.0
    %583 = vmatprep.subr.mxu0 0.0
    %584 = vmatpush2.msra.mxu0 0.0
    %585 = vmatprep.subr.mxu0 0.0
    %586 = vmatpush2.msra.mxu0 0.0
    %587 = vmatprep.subr.mxu0 0.0
    %588 = vmatpush2.msra.mxu0 0.0
    %589 = vmatprep.subr.mxu0 0.0
    %590 = vmatpush2.msra.mxu0 0.0
    %591 = vmatprep.subr.mxu0 0.0
    %592 = vmatpush2.msra.mxu0 0.0
    %593 = vmatprep.subr.mxu0 0.0
    %594 = vmatpush2.msra.mxu0 0.0
    %595 = vmatprep.subr.mxu0 0.0
    %596 = vmatpush2.msra.mxu0 0.0
    %597 = vmatprep.subr.mxu0 0.0
    %598 = vmatpush2.msra.mxu0 0.0
    %599 = vmatprep.subr.mxu0 0.0
    %600 = vmatpush2.msra.mxu0 0.0
    %601 = vmatprep.subr.mxu0 0.0
    %602 = vmatpush2.msra.mxu0 0.0
    %603 = vmatprep.subr.mxu0 0.0
    %604 = vmatpush2.msra.mxu0 0.0
    %605 = vmatprep.subr.mxu0 0.0
    %606 = vmatpush2.msra.mxu0 0.0
    %607 = vmatprep.subr.mxu0 0.0
    %608 = vmatpush2.msra.mxu0 0.0
    %609 = vmatprep.subr.mxu0 0.0
    %610 = vmatpush2.msra.mxu0 0.0
    %611 = vmatprep.subr.mxu0 0.0
    %612 = vmatpush2.msra.mxu0 0.0
    %613 = vmatprep.mubr.f32.mxu0 0.0
    %614 = vmatmul.mubr.f32.gmra.mxu0 %v547
    %v615 = vpop.f32.mrf.mxu0
    %v616 = vadd.f32 0.0, %v615
    %v617 = vpop.f32.mrf.mxu0
    %618 = vdwg.mxu0
    %v619 = vadd.f32 %v117, %v616
    %v620 = vxor.u32 %v619, 2147483648
    %v621 = vmul.f32 %v620, 1.442695
    %v622 = vpow.pop %v621
    %v623 = vadd.f32 %v622, 1.0
    %v624 = vrcp.pop %v623
    %v625 = vmul.f32 1.0, %v624
    %v626 = vtanh.pop %v619
    %v628 = vrot.slane %v536, 6
    %v630 = vmul.f32 %v625, %v628
    %632 = vrot.lane.b32.xlu0 %v626, 64
    %v633 = vpop.permute.xlu0 %632
    %v635 = vmul.f32 %v625, %v633
    %637 = vrot.lane.b32.xlu0 %v635, 32
    %v638 = vpop.permute.xlu0 %637
    %v640 = vadd.f32 %v630, %v638
    %v641 = vtanh.pop %v640
    %643 = vrot.lane.b32.xlu0 %v641, 64
    %v644 = vpop.permute.xlu0 %643
    %v646 = vmul.f32 %v625, %v644
    %648 = vrot.lane.b32.xlu0 %v646, 32
    %v649 = vpop.permute.xlu0 %648
    %v650 = vsel %vm124, %v649, 0
    %652 = vmatprep.subr.mxu0 0.0
    %653 = vmatpush1.msra.mxu0 0.0
    %654 = vmatprep.subr.mxu0 0.0
    %655 = vmatpush1.msra.mxu0 0.0
    %656 = vmatprep.subr.mxu0 0.0
    %657 = vmatpush1.msra.mxu0 0.0
    %658 = vmatprep.subr.mxu0 0.0
    %659 = vmatpush1.msra.mxu0 0.0
    %660 = vmatprep.subr.mxu0 0.0
    %661 = vmatpush1.msra.mxu0 0.0
    %662 = vmatprep.subr.mxu0 0.0
    %663 = vmatpush1.msra.mxu0 0.0
    %664 = vmatprep.subr.mxu0 0.0
    %665 = vmatpush1.msra.mxu0 0.0
    %666 = vmatprep.subr.mxu0 0.0
    %667 = vmatpush1.msra.mxu0 0.0
    %668 = vmatprep.subr.mxu0 0.0
    %669 = vmatpush1.msra.mxu0 0.0
    %670 = vmatprep.subr.mxu0 0.0
    %671 = vmatpush1.msra.mxu0 0.0
    %672 = vmatprep.subr.mxu0 0.0
    %673 = vmatpush1.msra.mxu0 0.0
    %674 = vmatprep.subr.mxu0 0.0
    %675 = vmatpush1.msra.mxu0 0.0
    %676 = vmatprep.subr.mxu0 0.0
    %677 = vmatpush1.msra.mxu0 %v123
    %678 = vmatprep.subr.mxu0 0.0
    %679 = vmatpush1.msra.mxu0 %v122
    %680 = vmatprep.subr.mxu0 0.0
    %681 = vmatpush1.msra.mxu0 %v121
    %682 = vmatprep.subr.mxu0 0.0
    %683 = vmatpush1.msra.mxu0 %v120
    %684 = vmatprep.subr.mxu0 0.0
    %685 = vmatpush2.msra.mxu0 0.0
    %686 = vmatprep.subr.mxu0 0.0
    %687 = vmatpush2.msra.mxu0 0.0
    %688 = vmatprep.subr.mxu0 0.0
    %689 = vmatpush2.msra.mxu0 0.0
    %690 = vmatprep.subr.mxu0 0.0
    %691 = vmatpush2.msra.mxu0 0.0
    %692 = vmatprep.subr.mxu0 0.0
    %693 = vmatpush2.msra.mxu0 0.0
    %694 = vmatprep.subr.mxu0 0.0
    %695 = vmatpush2.msra.mxu0 0.0
    %696 = vmatprep.subr.mxu0 0.0
    %697 = vmatpush2.msra.mxu0 0.0
    %698 = vmatprep.subr.mxu0 0.0
    %699 = vmatpush2.msra.mxu0 0.0
    %700 = vmatprep.subr.mxu0 0.0
    %701 = vmatpush2.msra.mxu0 0.0
    %702 = vmatprep.subr.mxu0 0.0
    %703 = vmatpush2.msra.mxu0 0.0
    %704 = vmatprep.subr.mxu0 0.0
    %705 = vmatpush2.msra.mxu0 0.0
    %706 = vmatprep.subr.mxu0 0.0
    %707 = vmatpush2.msra.mxu0 0.0
    %708 = vmatprep.subr.mxu0 0.0
    %709 = vmatpush2.msra.mxu0 0.0
    %710 = vmatprep.subr.mxu0 0.0
    %711 = vmatpush2.msra.mxu0 0.0
    %712 = vmatprep.subr.mxu0 0.0
    %713 = vmatpush2.msra.mxu0 0.0
    %714 = vmatprep.subr.mxu0 0.0
    %715 = vmatpush2.msra.mxu0 0.0
    %716 = vmatprep.mubr.f32.mxu0 0.0
    %717 = vmatmul.mubr.f32.gmra.mxu0 %v650
    %v718 = vpop.f32.mrf.mxu0
    %v719 = vadd.f32 0.0, %v718
    %v720 = vpop.f32.mrf.mxu0
    %721 = vdwg.mxu0
    %v723 = vrot.slane %v719, 6
    %v725 = vadd.f32 %v117, %v723
    %v726 = vxor.u32 %v725, 2147483648
    %v727 = vmul.f32 %v726, 1.442695
    %v728 = vpow.pop %v727
    %v729 = vadd.f32 %v728, 1.0
    %v730 = vrcp.pop %v729
    %v731 = vmul.f32 1.0, %v730
    %v732 = vtanh.pop %v725
    %v734 = vrot.slane %v640, 6
    %v736 = vmul.f32 %v731, %v734
    %738 = vrot.lane.b32.xlu0 %v732, 64
    %v739 = vpop.permute.xlu0 %738
    %v741 = vmul.f32 %v731, %v739
    %743 = vrot.lane.b32.xlu0 %v741, 32
    %v744 = vpop.permute.xlu0 %743
    %v746 = vadd.f32 %v736, %v744
    %v747 = vtanh.pop %v746
    %749 = vrot.lane.b32.xlu0 %v747, 64
    %v750 = vpop.permute.xlu0 %749
    %v752 = vmul.f32 %v731, %v750
    %v754 = vrot.slane %v752, 2
    %755 = vrot.lane.b32.xlu0 %v754, 32
    %v756 = vpop.permute.xlu0 %755
    %v757 = vsel %vm124, %v756, 0
    %759 = vmatprep.subr.mxu0 0.0
    %760 = vmatpush1.msra.mxu0 0.0
    %761 = vmatprep.subr.mxu0 0.0
    %762 = vmatpush1.msra.mxu0 0.0
    %763 = vmatprep.subr.mxu0 0.0
    %764 = vmatpush1.msra.mxu0 0.0
    %765 = vmatprep.subr.mxu0 0.0
    %766 = vmatpush1.msra.mxu0 0.0
    %767 = vmatprep.subr.mxu0 0.0
    %768 = vmatpush1.msra.mxu0 0.0
    %769 = vmatprep.subr.mxu0 0.0
    %770 = vmatpush1.msra.mxu0 0.0
    %771 = vmatprep.subr.mxu0 0.0
    %772 = vmatpush1.msra.mxu0 0.0
    %773 = vmatprep.subr.mxu0 0.0
    %774 = vmatpush1.msra.mxu0 0.0
    %775 = vmatprep.subr.mxu0 0.0
    %776 = vmatpush1.msra.mxu0 0.0
    %777 = vmatprep.subr.mxu0 0.0
    %778 = vmatpush1.msra.mxu0 0.0
    %779 = vmatprep.subr.mxu0 0.0
    %780 = vmatpush1.msra.mxu0 0.0
    %781 = vmatprep.subr.mxu0 0.0
    %782 = vmatpush1.msra.mxu0 0.0
    %783 = vmatprep.subr.mxu0 0.0
    %784 = vmatpush1.msra.mxu0 %v123
    %785 = vmatprep.subr.mxu0 0.0
    %786 = vmatpush1.msra.mxu0 %v122
    %787 = vmatprep.subr.mxu0 0.0
    %788 = vmatpush1.msra.mxu0 %v121
    %789 = vmatprep.subr.mxu0 0.0
    %790 = vmatpush1.msra.mxu0 %v120
    %791 = vmatprep.subr.mxu0 0.0
    %792 = vmatpush2.msra.mxu0 0.0
    %793 = vmatprep.subr.mxu0 0.0
    %794 = vmatpush2.msra.mxu0 0.0
    %795 = vmatprep.subr.mxu0 0.0
    %796 = vmatpush2.msra.mxu0 0.0
    %797 = vmatprep.subr.mxu0 0.0
    %798 = vmatpush2.msra.mxu0 0.0
    %799 = vmatprep.subr.mxu0 0.0
    %800 = vmatpush2.msra.mxu0 0.0
    %801 = vmatprep.subr.mxu0 0.0
    %802 = vmatpush2.msra.mxu0 0.0
    %803 = vmatprep.subr.mxu0 0.0
    %804 = vmatpush2.msra.mxu0 0.0
    %805 = vmatprep.subr.mxu0 0.0
    %806 = vmatpush2.msra.mxu0 0.0
    %807 = vmatprep.subr.mxu0 0.0
    %808 = vmatpush2.msra.mxu0 0.0
    %809 = vmatprep.subr.mxu0 0.0
    %810 = vmatpush2.msra.mxu0 0.0
    %811 = vmatprep.subr.mxu0 0.0
    %812 = vmatpush2.msra.mxu0 0.0
    %813 = vmatprep.subr.mxu0 0.0
    %814 = vmatpush2.msra.mxu0 0.0
    %815 = vmatprep.subr.mxu0 0.0
    %816 = vmatpush2.msra.mxu0 0.0
    %817 = vmatprep.subr.mxu0 0.0
    %818 = vmatpush2.msra.mxu0 0.0
    %819 = vmatprep.subr.mxu0 0.0
    %820 = vmatpush2.msra.mxu0 0.0
    %821 = vmatprep.subr.mxu0 0.0
    %822 = vmatpush2.msra.mxu0 0.0
    %823 = vmatprep.mubr.f32.mxu0 0.0
    %824 = vmatmul.mubr.f32.gmra.mxu0 %v757
    %v825 = vpop.f32.mrf.mxu0
    %v826 = vadd.f32 0.0, %v825
    %v827 = vpop.f32.mrf.mxu0
    %828 = vdwg.mxu0
    %v830 = vrot.slane %v826, 4
    %v832 = vadd.f32 %v117, %v830
    %v833 = vxor.u32 %v832, 2147483648
    %v834 = vmul.f32 %v833, 1.442695
    %v835 = vpow.pop %v834
    %v836 = vadd.f32 %v835, 1.0
    %v837 = vrcp.pop %v836
    %v838 = vmul.f32 1.0, %v837
    %v839 = vtanh.pop %v832
    %v841 = vrot.slane %v746, 6
    %v843 = vmul.f32 %v838, %v841
    %845 = vrot.lane.b32.xlu0 %v839, 64
    %v846 = vpop.permute.xlu0 %845
    %v848 = vmul.f32 %v838, %v846
    %850 = vrot.lane.b32.xlu0 %v848, 32
    %v851 = vpop.permute.xlu0 %850
    %v853 = vadd.f32 %v843, %v851
    %v854 = vtanh.pop %v853
    %856 = vrot.lane.b32.xlu0 %v854, 64
    %v857 = vpop.permute.xlu0 %856
    %v859 = vmul.f32 %v838, %v857
    %861 = vrot.lane.b32.xlu0 %v330, 64
    %v862 = vpop.permute.xlu0 %861
    %864 = vrot.lane.b32.xlu0 %v437, 96
    %v865 = vpop.permute.xlu0 %864
    %869 = vrot.lane.b32.xlu0 %v754, 64
    %v870 = vpop.permute.xlu0 %869
    %v873 = vrot.slane %v859, 4
    %874 = vrot.lane.b32.xlu0 %v873, 96
    %v875 = vpop.permute.xlu0 %874
    %v877 = vsel %vm124, %v225, %v862
    %vm878 = vcmask 523264
    %v879 = vsel %vm878, %v877, %v865
    %vm880 = vcmask 785408
    %v881 = vsel %vm880, %v879, %v544
    %v882 = vsel %vm124, %v649, %v870
    %v883 = vsel %vm878, %v882, %v875
    %v884 = vld [vmem:[%s4] sm:$0xff]
    %v885 = vld [vmem:[%s4 + $0x8] sm:$0xff]
    %v886 = vld [vmem:[%s4 + $0x10] sm:$0xff]
    %v887 = vld [vmem:[%s4 + $0x18] sm:$0xff]
    %v888 = vld [vmem:[%s4 + $0x20] sm:$0xff]
    %v889 = vld [vmem:[%s4 + $0x28] sm:$0xff]
    %v890 = vld [vmem:[%s4 + $0x30] sm:$0xff]
    %v891 = vld [vmem:[%s4 + $0x38] sm:$0xff]
    %v892 = vld [vmem:[%s4 + $0x40] sm:$0xff]
    %v893 = vld [vmem:[%s4 + $0x48] sm:$0xff]
    %v894 = vld [vmem:[%s4 + $0x50] sm:$0xff]
    %v895 = vld [vmem:[%s4 + $0x58] sm:$0xff]
    %v896 = vld [vmem:[%s4 + $0x60] sm:$0xff]
    %v897 = vld [vmem:[%s4 + $0x68] sm:$0xff]
    %v898 = vld [vmem:[%s4 + $0x70] sm:$0xff]
    %v899 = vld [vmem:[%s4 + $0x78] sm:$0xff]
    %v900 = vld [vmem:[%s4 + $0x80] sm:$0xff]
    %v901 = vld [vmem:[%s4 + $0x88] sm:$0xff]
    %v902 = vld [vmem:[%s4 + $0x90] sm:$0xff]
    %v903 = vld [vmem:[%s4 + $0x98] sm:$0xff]
    %v904 = vld [vmem:[%s4 + $0xa0] sm:$0xff]
    %v905 = vld [vmem:[%s4 + $0xa8] sm:$0xff]
    %v906 = vld [vmem:[%s4 + $0xb0] sm:$0xff]
    %v907 = vld [vmem:[%s4 + $0xb8] sm:$0xff]
    %v908 = vld [vmem:[%s4 + $0xc0] sm:$0xff]
    %v909 = vld [vmem:[%s4 + $0xc8] sm:$0xff]
    %v910 = vld [vmem:[%s4 + $0xd0] sm:$0xff]
    %v911 = vld [vmem:[%s4 + $0xd8] sm:$0xff]
    %v912 = vld [vmem:[%s5] sm:$0x1]
    %v914 = vlaneseq
    %v915 = vshrl.u32 %v914, 7
    %v916 = vsub.s32 0, %v915
    %v917 = vrot.slane %v912, %v916
    %v920 = vsel %vm880, %v883, 0
    %922 = vmatprep.subr.mxu0 0.0
    %923 = vmatpush1.msra.mxu0 %v899
    %924 = vmatprep.subr.mxu0 0.0
    %925 = vmatpush1.msra.mxu0 %v898
    %926 = vmatprep.subr.mxu0 0.0
    %927 = vmatpush1.msra.mxu0 %v897
    %928 = vmatprep.subr.mxu0 0.0
    %929 = vmatpush1.msra.mxu0 %v896
    %930 = vmatprep.subr.mxu0 0.0
    %931 = vmatpush1.msra.mxu0 %v895
    %932 = vmatprep.subr.mxu0 0.0
    %933 = vmatpush1.msra.mxu0 %v894
    %934 = vmatprep.subr.mxu0 0.0
    %935 = vmatpush1.msra.mxu0 %v893
    %936 = vmatprep.subr.mxu0 0.0
    %937 = vmatpush1.msra.mxu0 %v892
    %938 = vmatprep.subr.mxu0 0.0
    %939 = vmatpush1.msra.mxu0 %v891
    %940 = vmatprep.subr.mxu0 0.0
    %941 = vmatpush1.msra.mxu0 %v890
    %942 = vmatprep.subr.mxu0 0.0
    %943 = vmatpush1.msra.mxu0 %v889
    %944 = vmatprep.subr.mxu0 0.0
    %945 = vmatpush1.msra.mxu0 %v888
    %946 = vmatprep.subr.mxu0 0.0
    %947 = vmatpush1.msra.mxu0 %v887
    %948 = vmatprep.subr.mxu0 0.0
    %949 = vmatpush1.msra.mxu0 %v886
    %950 = vmatprep.subr.mxu0 0.0
    %951 = vmatpush1.msra.mxu0 %v885
    %952 = vmatprep.subr.mxu0 0.0
    %953 = vmatpush1.msra.mxu0 %v884
    %954 = vmatprep.subr.mxu0 0.0
    %955 = vmatpush2.msra.mxu0 0.0
    %956 = vmatprep.subr.mxu0 0.0
    %957 = vmatpush2.msra.mxu0 0.0
    %958 = vmatprep.subr.mxu0 0.0
    %959 = vmatpush2.msra.mxu0 0.0
    %960 = vmatprep.subr.mxu0 0.0
    %961 = vmatpush2.msra.mxu0 0.0
    %962 = vmatprep.subr.mxu0 0.0
    %963 = vmatpush2.msra.mxu0 %v911
    %964 = vmatprep.subr.mxu0 0.0
    %965 = vmatpush2.msra.mxu0 %v910
    %966 = vmatprep.subr.mxu0 0.0
    %967 = vmatpush2.msra.mxu0 %v909
    %968 = vmatprep.subr.mxu0 0.0
    %969 = vmatpush2.msra.mxu0 %v908
    %970 = vmatprep.subr.mxu0 0.0
    %971 = vmatpush2.msra.mxu0 %v907
    %972 = vmatprep.subr.mxu0 0.0
    %973 = vmatpush2.msra.mxu0 %v906
    %974 = vmatprep.subr.mxu0 0.0
    %975 = vmatpush2.msra.mxu0 %v905
    %976 = vmatprep.subr.mxu0 0.0
    %977 = vmatpush2.msra.mxu0 %v904
    %978 = vmatprep.subr.mxu0 0.0
    %979 = vmatpush2.msra.mxu0 %v903
    %980 = vmatprep.subr.mxu0 0.0
    %981 = vmatpush2.msra.mxu0 %v902
    %982 = vmatprep.subr.mxu0 0.0
    %983 = vmatpush2.msra.mxu0 %v901
    %984 = vmatprep.subr.mxu0 0.0
    %985 = vmatpush2.msra.mxu0 %v900
    %986 = vmatprep.mubr.f32.mxu0 %v920
    %987 = vmatmul.mubr.f32.gmra.mxu0 %v881
    %v988 = vpop.f32.mrf.mxu0
    %v989 = vadd.f32 %v917, %v988
    %v990 = vpop.f32.mrf.mxu0
    %991 = vdwg.mxu0
    %vm992 = vcmask 25600
    %993 = vst.msk [vmem:[#allocation2] sm:$0x3] %vm992, %v989
    // Predicated region
    $region26: #{tpu_custom_call.1} parent=1 // pred_check
      _
    $region27: #{tpu_custom_call.1} parent=1 // pred_check_branch
      %995 = sbr.rel (0) target = $region29
    $region28: #{tpu_custom_call.1} parent=1 // pred_region
      %s997 = ssub.s32 32, 32
      %998 = vsyncadd [#allocation3], %s997
      %s1000 = sshll.u32 [#allocation2], 4
      %s1001 = int_to_ptr.vmem [resolvable:$true] %s1000
      %1003 = dma.vmem_to_hbm [thread:$0]  %s1001, 32, %s6, [#allocation3]
    $region29: #{tpu_custom_call.1} parent=1 // pred_fallthru
      _
    // Predicated region
    $region30: #{tpu_custom_call.1} parent=1 // pred_check
      _
    $region31: #{tpu_custom_call.1} parent=1 // pred_check_branch
      %1005 = sbr.rel (0) target = $region33
    $region32: #{tpu_custom_call.1} parent=1 // pred_region
      %1006 = dma.done [#allocation3], 32
    $region33: #{tpu_custom_call.1} parent=1 // pred_fallthru
      _
    %1007 = vsyncpa [#allocation3], 1

</llo_original>
